<compile_context>
chip_gen: v7x
topology: tpu7x:2x2x1
jax: 0.10.0
libtpu: 0.0.40
codegen_flags: <defaults>
</compile_context>

<pallas_src>
import math
import functools

import jax
import jax.numpy as jnp
from jax.experimental import pallas as pl
from jax.experimental.pallas import tpu as pltpu


# Index order inside the packed [3, L, L] weight operand.
_W2, _WO, _WF = range(3)


def latent_encoder_kernel(d_ref, w1_ref, w3_ref, wkv_ref, qT_ref, aux_ref, bkv_ref, out_ref,
                          *, block_b, set_size, num_heads, num_seeds):
    """One grid step = one chunk of `block_b` batch elements; writes that chunk's SUM over batch."""
    Bb, N, S, H = block_b, set_size, num_seeds, num_heads
    L = w3_ref.shape[-1]
    dh = L // H
    mdt = w1_ref.dtype            # MXU matmul dtype (bfloat16); accumulation stays fp32
    f32 = jnp.float32

    aux = aux_ref[...]            # [4+S, L] fp32: b1, b2, bo, bf, then q (for the MAB residual)
    b1, b2, bo, bf = (aux[i:i + 1] for i in range(4))
    q_res = aux[4:4 + S]          # [S, L] projected seed (seed@Wq + bq), grid-invariant
    bkv = bkv_ref[...]            # [1, 2L] fused K|V bias

    # ---- label_encoder MLP (2 layers); d is already flattened to [Bb*N, Dc]. ----
    h = jnp.dot(d_ref[...], w1_ref[...], preferred_element_type=f32) + b1
    h = jax.nn.relu(h)
    h = jnp.dot(h.astype(mdt), w3_ref[_W2], preferred_element_type=f32) + b2      # [Bb*N, L]
    h_bf = h.astype(mdt)                                                           # single cast

    # ---- SetTransformer PMA: fused K|V projection, one wide matmul. ----
    kv = jnp.dot(h_bf, wkv_ref[...], preferred_element_type=f32) + bkv             # [Bb*N, 2L]

    # Attention logits for ALL heads in one large-M f32 matmul against the packed, pre-scaled
    # block-diagonal q^T (V-rows of qT are zero, so only the K half contributes).
    logits = jnp.dot(kv, qT_ref[...], preferred_element_type=f32)                  # [Bb*N, H*S]
    logits = logits.reshape(Bb, N, H * S)

    # Softmax over the set dimension N.
    logits = logits - jnp.max(logits, axis=1, keepdims=True)
    p = jnp.exp(logits)
    inv = pl.reciprocal(jnp.sum(p, axis=1, keepdims=True), approx=True)            # EUP slot
    attn = p * inv                                                                  # [Bb, N, H*S]

    v3 = kv[:, L:].reshape(Bb, N, L)                                               # values

    # attn @ V on the VPU (S is tiny). Heads stay full-L and are masked (no lane slicing of v).
    if H == 1 and S == 1:
        o_attn = jnp.sum(attn * v3, axis=1)[:, None, :]                            # [Bb, 1, L]
    elif H == 1:
        o_attn = jnp.sum(attn[:, :, :, None] * v3[:, :, None, :], axis=1)          # [Bb, S, L]
    else:
        lane = jax.lax.broadcasted_iota(jnp.int32, (1, 1, L), 2)
        o_attn = jnp.zeros((Bb, S, L), f32)
        for hi in range(H):                                                         # H is small
            a_h = attn[:, :, hi * S:(hi + 1) * S]                                   # [Bb, N, S]
            ctx = jnp.sum(a_h[:, :, :, None] * v3[:, :, None, :], axis=1)           # [Bb, S, L]
            mask = ((lane >= hi * dh) & (lane < (hi + 1) * dh)).astype(f32)
            o_attn = o_attn + ctx * mask

    o = q_res[None] + o_attn                                                        # MAB residual

    # Residual FF + output Linear of the SetTransformer (flatten batch*seeds again).
    of = o.reshape(Bb * S, L)
    of = of + jax.nn.relu(
        jnp.dot(of.astype(mdt), w3_ref[_WO], preferred_element_type=f32) + bo)
    s_out = jnp.dot(of.astype(mdt), w3_ref[_WF], preferred_element_type=f32) + bf  # [Bb*S, L]

    # Per-chunk partial SUM over the batch chunk; wrapper divides by B once at the end.
    out_ref[0] = jnp.sum(s_out.reshape(Bb, S, L), axis=0)


def _vmem_capacity_bytes():
    try:
        cap = getattr(pltpu.get_tpu_info(), "vmem_capacity_bytes", None)
        return int(cap) if cap else 64 << 20
    except Exception:
        return 64 << 20           # conservative default (v7x per-core VMEM)


def _bytes_per_row(L, Dc):
    lanes = max(128, 2 * L)       # everything is lane-padded to >=128 in VMEM
    # 2x double-buffered bf16 input row + ~8 fp32 [row, <=2L] intermediates per row.
    return 2 * 2 * max(128, Dc) + 8 * lanes * 4


def _pick_block_b(B, N, L, Dc):
    """Largest divisor of B giving >=2 chunks (keeps v7x's 2nd core busy), rows that fit a
    conservative VMEM budget and a bf16-packing-friendly (multiple-of-16) sublane count."""
    vmem = _vmem_capacity_bytes()
    max_rows = max(N, (vmem // 2) // _bytes_per_row(L, Dc))
    best = None
    for cand in range(1, max(1, B // 2) + 1):
        if B % cand:
            continue
        rows = cand * N
        if rows > max_rows:
            continue
        if rows % 16:             # keep the flattened bf16 d block tiling-legal
            continue
        best = cand
    if best is None:
        # Fall back to a single chunk (block == full array, always legal) when it fits.
        best = B if B * N <= max_rows else 1
        # TODO(synk): for huge B*N with awkward N, tile N as a reduction axis instead.
    return best


def latent_encoder(x, y, params, *, num_heads=1, block_b=None, matmul_dtype=jnp.bfloat16):
    B, N, D = x.shape
    _, _, C = y.shape
    S, L = params["seed"].shape
    H = num_heads
    assert L % H == 0, "latent_dim must be divisible by num_heads"
    dh = L // H
    Dc = D + C
    f32 = jnp.float32

    # Fuse x/y (and W1x/W1y) so the concat folds into one matmul; pre-flatten to [B*N, Dc].
    d = jnp.concatenate([x, y], axis=-1).reshape(B * N, Dc).astype(matmul_dtype)
    w1 = jnp.concatenate([params["w1x"], params["w1y"]], axis=0).astype(matmul_dtype)   # [Dc, L]

    # Packed LxL weights (W2, Wo, Wf) and fused K|V projection / bias.
    w3 = jnp.stack([params["w2"], params["wo"], params["wf"]]).astype(matmul_dtype)     # [3, L, L]
    wkv = jnp.concatenate([params["wk"], params["wv"]], axis=1).astype(matmul_dtype)    # [L, 2L]
    bkv = jnp.concatenate([params["bk"].reshape(1, L),
                           params["bv"].reshape(1, L)], axis=1).astype(f32)             # [1, 2L]

    # Grid-invariant query work hoisted out of the kernel: q = seed@Wq + bq (used for the MAB
    # residual) and a pre-scaled, per-head block-diagonal q^T against the fused [*, 2L] K|V
    # tensor (V-rows zeroed) so in-kernel logits are one large-M matmul.
    q = (jnp.dot(params["seed"].astype(f32), params["wq"].astype(f32),
                 preferred_element_type=f32) + params["bq"].reshape(1, L).astype(f32))   # [S, L]
    scale = 1.0 / math.sqrt(L)
    qT = jnp.zeros((2 * L, H * S), f32)
    for hi in range(H):
        blk = (q[:, hi * dh:(hi + 1) * dh] * scale).T                                   # [dh, S]
        qT = qT.at[hi * dh:(hi + 1) * dh, hi * S:(hi + 1) * S].set(blk)

    aux = jnp.concatenate([params["b1"].reshape(1, L), params["b2"].reshape(1, L),
                           params["bo"].reshape(1, L), params["bf"].reshape(1, L),
                           q], axis=0).astype(f32)                                      # [4+S, L]

    if block_b is None:
        block_b = _pick_block_b(B, N, L, Dc)
    assert B % block_b == 0, "block_b must divide the batch size"
    num_chunks = B // block_b

    # Explicit VMEM budget with headroom (32 MiB floor; never above 75% of physical VMEM).
    vmem_phys = _vmem_capacity_bytes()
    need = block_b * N * _bytes_per_row(L, Dc) + (4 << 20)
    vmem_limit = int(min(0.75 * vmem_phys, max(32 << 20, 2 * need)))

    HS = H * S
    flops = (2 * B * N * Dc * L            # W1
             + 2 * B * N * L * L           # W2
             + 2 * B * N * L * 2 * L       # fused K|V
             + 2 * B * N * 2 * L * HS      # logits
             + 2 * B * N * S * L           # attn @ V
             + 2 * B * S * L * L * 2)      # FF + output Linear
    bytes_accessed = (d.size * 2 + (w1.size + w3.size + wkv.size) * 2
                      + (qT.size + aux.size + bkv.size) * 4 + num_chunks * S * L * 4)
    cost = pl.CostEstimate(flops=int(flops), transcendentals=int(B * N * HS),
                           bytes_accessed=int(bytes_accessed))

    kernel = functools.partial(latent_encoder_kernel, block_b=block_b, set_size=N,
                               num_heads=H, num_seeds=S)

    partial_sums = pl.pallas_call(
        kernel,
        out_shape=jax.ShapeDtypeStruct((num_chunks, S, L), jnp.float32),
        grid_spec=pltpu.PrefetchScalarGridSpec(
            num_scalar_prefetch=0,
            grid=(num_chunks,),
            in_specs=[
                pl.BlockSpec((block_b * N, Dc), lambda c: (c, 0)),     # flattened x|y chunk
                pl.BlockSpec((Dc, L), lambda c: (0, 0)),               # fused W1
                pl.BlockSpec((3, L, L), lambda c: (0, 0, 0)),          # packed W2/Wo/Wf
                pl.BlockSpec((L, 2 * L), lambda c: (0, 0)),            # fused Wk|Wv
                pl.BlockSpec((2 * L, HS), lambda c: (0, 0)),           # packed/scaled q^T
                pl.BlockSpec((4 + S, L), lambda c: (0, 0)),            # biases + q (residual)
                pl.BlockSpec((1, 2 * L), lambda c: (0, 0)),            # fused bk|bv
            ],
            out_specs=pl.BlockSpec((1, S, L), lambda c: (c, 0, 0)),
        ),
        compiler_params=pltpu.CompilerParams(
            # Chunks are independent (each writes its own partial-sum slice) -> 'parallel'
            # lets v7x's two TensorCores split the grid; harmless on v5e/v6e.
            dimension_semantics=("parallel",),
            vmem_limit_bytes=vmem_limit),
        cost_estimate=cost,
    )(d, w1, w3, wkv, qT, aux, bkv)

    # s.mean(0): sum of per-chunk sums, divided by B once outside the kernel.
    return partial_sums.sum(axis=0) / B


def latent_encoder_reference(x, y, params, *, num_heads=1, matmul_dtype=jnp.bfloat16):
    """Pure-JAX reference mirroring the PyTorch forward (same matmul-dtype cast points)."""
    f32 = jnp.float32
    dot = lambda a, w: jnp.dot(a.astype(matmul_dtype), w.astype(matmul_dtype),
                               preferred_element_type=f32)

    d = jnp.concatenate([x, y], axis=-1)
    w1 = jnp.concatenate([params["w1x"], params["w1y"]], axis=0)
    h = jax.nn.relu(dot(d, w1) + params["b1"])
    h = dot(h, params["w2"]) + params["b2"]                           # [B, N, L]

    S, L = params["seed"].shape
    # q is computed in fp32 in the kernel wrapper (grid-invariant hoist); mirror that here.
    q = jnp.dot(params["seed"], params["wq"], preferred_element_type=f32) + params["bq"]
    k = dot(h, params["wk"]) + params["bk"]                           # [B, N, L]
    v = dot(h, params["wv"]) + params["bv"]

    dh = L // num_heads
    outs = []
    for hi in range(num_heads):
        sl = slice(hi * dh, (hi + 1) * dh)
        logits = jnp.einsum("sd,bnd->bsn", q[:, sl], k[..., sl],
                            preferred_element_type=f32) / math.sqrt(L)
        a = jax.nn.softmax(logits, axis=-1)
        outs.append(jnp.einsum("bsn,bnd->bsd", a, v[..., sl], preferred_element_type=f32))
    o = outs[0] if num_heads == 1 else jnp.concatenate(outs, axis=-1)
    o = q[None] + o                                                   # [B, S, L]
    o = o + jax.nn.relu(dot(o, params["wo"]) + params["bo"])
    out = dot(o, params["wf"]) + params["bf"]
    return out.mean(0)                                                # [S, L]


def make_params(key, input_dim, num_classes, latent_dim, seeds):
    ks = jax.random.split(key, 16)
    n = lambda k, shape, scale=0.1: (scale * jax.random.normal(k, shape)).astype(jnp.float32)
    return {
        # label_encoder MLP (W1 split into x-part / y-part; the wrapper fuses them)
        "w1x": n(ks[0], (input_dim, latent_dim)),
        "w1y": n(ks[1], (num_classes, latent_dim)),
        "b1":  n(ks[2], (1, latent_dim)),
        "w2":  n(ks[3], (latent_dim, latent_dim)),
        "b2":  n(ks[4], (1, latent_dim)),
        # PMA seed + MAB projections
        "seed": n(ks[5], (seeds, latent_dim), 1.0),
        "wq":  n(ks[6], (latent_dim, latent_dim)),
        "bq":  n(ks[7], (1, latent_dim)),
        "wk":  n(ks[8], (latent_dim, latent_dim)),
        "bk":  n(ks[9], (1, latent_dim)),
        "wv":  n(ks[10], (latent_dim, latent_dim)),
        "bv":  n(ks[11], (1, latent_dim)),
        "wo":  n(ks[12], (latent_dim, latent_dim)),
        "bo":  n(ks[13], (1, latent_dim)),
        # output Linear of the SetTransformer
        "wf":  n(ks[14], (latent_dim, latent_dim)),
        "bf":  n(ks[15], (1, latent_dim)),
    }


if __name__ == "__main__":
    B, N = 4, 16                # batch, set size (context points)
    input_dim, num_classes = 4, 4
    latent_dim = 32
    seeds, num_heads = 1, 1

    key = jax.random.PRNGKey(0)
    kx, ky, kp = jax.random.split(key, 3)
    x = jax.random.normal(kx, (B, N, input_dim), dtype=jnp.float32)
    y = jax.nn.one_hot(jax.random.randint(ky, (B, N), 0, num_classes),
                       num_classes, dtype=jnp.float32)

    params = make_params(kp, input_dim, num_classes, latent_dim, seeds)

    out = jax.block_until_ready(latent_encoder(x, y, params, num_heads=num_heads))
    assert out.shape == (seeds, latent_dim)

    # Check against a reference with matching bf16 matmul cast points (tolerance loosened
    # slightly to cover pl.reciprocal(approx=True) in the softmax normalization)...
    ref = latent_encoder_reference(x, y, params, num_heads=num_heads)
    assert jnp.allclose(out, ref, atol=1e-2, rtol=1e-2), "Pallas kernel mismatch vs reference"

    # ...and against a full-fp32 reference (looser tolerance for bf16 matmul rounding).
    ref_f32 = latent_encoder_reference(x, y, params, num_heads=num_heads,
                                       matmul_dtype=jnp.float32)
    assert jnp.allclose(out, ref_f32, atol=5e-2, rtol=5e-2), "Kernel drifted from fp32 reference"

    print("KERNEL_OK")
</pallas_src>

<mosaic_0001>
module attributes {stable_mosaic.version = 11 : i64} {
  func.func @latent_encoder_kernel(%arg0: i32, %arg1: memref<32x8xbf16, #tpu.memory_space<vmem>>, %arg2: memref<8x32xbf16, #tpu.memory_space<vmem>>, %arg3: memref<3x32x32xbf16, #tpu.memory_space<vmem>>, %arg4: memref<32x64xbf16, #tpu.memory_space<vmem>>, %arg5: memref<64x1xf32, #tpu.memory_space<vmem>>, %arg6: memref<5x32xf32, #tpu.memory_space<vmem>>, %arg7: memref<1x64xf32, #tpu.memory_space<vmem>>, %arg8: memref<1x1x32xf32, #tpu.memory_space<vmem>>) attributes {dimension_semantics = [#tpu.dimension_semantics<parallel>], iteration_bounds = array<i64: 2>, scalar_prefetch = 0 : i64, scratch_operands = 0 : i64, tpu.core_type = #tpu.core_type<tc>, window_params = [{transform_indices = @transform_0, window_bounds = array<i64: 32, 8>}, {pipeline_mode = #tpu.pipeline_mode<synchronous>, transform_indices = @transform_1, window_bounds = array<i64: 8, 32>}, {pipeline_mode = #tpu.pipeline_mode<synchronous>, transform_indices = @transform_2, window_bounds = array<i64: 3, 32, 32>}, {pipeline_mode = #tpu.pipeline_mode<synchronous>, transform_indices = @transform_3, window_bounds = array<i64: 32, 64>}, {pipeline_mode = #tpu.pipeline_mode<synchronous>, transform_indices = @transform_4, window_bounds = array<i64: 64, 1>}, {pipeline_mode = #tpu.pipeline_mode<synchronous>, transform_indices = @transform_5, window_bounds = array<i64: 5, 32>}, {pipeline_mode = #tpu.pipeline_mode<synchronous>, transform_indices = @transform_6, window_bounds = array<i64: 1, 64>}, {transform_indices = @transform_7, window_bounds = array<i64: 1, 1, 32>}]} {
    %c0 = arith.constant 0 : index
    %c0_0 = arith.constant 0 : index
    %0 = vector.load %arg6[%c0, %c0_0] : memref<5x32xf32, #tpu.memory_space<vmem>>, vector<5x32xf32>
    %1 = vector.extract_strided_slice %0 {offsets = [0, 0], sizes = [1, 32], strides = [1, 1]} : vector<5x32xf32> to vector<1x32xf32>
    %2 = vector.extract_strided_slice %0 {offsets = [1, 0], sizes = [1, 32], strides = [1, 1]} : vector<5x32xf32> to vector<1x32xf32>
    %3 = vector.extract_strided_slice %0 {offsets = [2, 0], sizes = [1, 32], strides = [1, 1]} : vector<5x32xf32> to vector<1x32xf32>
    %4 = vector.extract_strided_slice %0 {offsets = [3, 0], sizes = [1, 32], strides = [1, 1]} : vector<5x32xf32> to vector<1x32xf32>
    %5 = vector.extract_strided_slice %0 {offsets = [4, 0], sizes = [1, 32], strides = [1, 1]} : vector<5x32xf32> to vector<1x32xf32>
    %c0_1 = arith.constant 0 : index
    %c0_2 = arith.constant 0 : index
    %6 = vector.load %arg7[%c0_1, %c0_2] : memref<1x64xf32, #tpu.memory_space<vmem>>, vector<1x64xf32>
    %c0_3 = arith.constant 0 : index
    %c0_4 = arith.constant 0 : index
    %7 = vector.load %arg1[%c0_3, %c0_4] : memref<32x8xbf16, #tpu.memory_space<vmem>>, vector<32x8xbf16>
    %c0_5 = arith.constant 0 : index
    %c0_6 = arith.constant 0 : index
    %8 = vector.load %arg2[%c0_5, %c0_6] : memref<8x32xbf16, #tpu.memory_space<vmem>>, vector<8x32xbf16>
    %cst = arith.constant dense<0.000000e+00> : vector<32x32xf32>
    %9 = tpu.matmul %7, %8, %cst {dimension_numbers = #tpu.dot_dimension_numbers<[1], [0], [0], [1], [0, 0, 1, 1], [], []>} : vector<32x8xbf16>, vector<8x32xbf16>, vector<32x32xf32> -> vector<32x32xf32>
    %10 = vector.broadcast %1 : vector<1x32xf32> to vector<32x32xf32>
    %11 = arith.addf %9, %10 : vector<32x32xf32>
    %cst_7 = arith.constant 0.000000e+00 : f32
    %12 = vector.broadcast %cst_7 : f32 to vector<32x32xf32>
    %13 = arith.maximumf %11, %12 : vector<32x32xf32>
    %14 = arith.truncf %13 : vector<32x32xf32> to vector<32x32xbf16>
    %c0_8 = arith.constant 0 : index
    %c0_9 = arith.constant 0 : index
    %c0_10 = arith.constant 0 : index
    %15 = vector.load %arg3[%c0_8, %c0_9, %c0_10] : memref<3x32x32xbf16, #tpu.memory_space<vmem>>, vector<1x32x32xbf16>
    %16 = vector.shape_cast %15 : vector<1x32x32xbf16> to vector<32x32xbf16>
    %cst_11 = arith.constant dense<0.000000e+00> : vector<32x32xf32>
    %17 = tpu.matmul %14, %16, %cst_11 {dimension_numbers = #tpu.dot_dimension_numbers<[1], [0], [0], [1], [0, 0, 1, 1], [], []>} : vector<32x32xbf16>, vector<32x32xbf16>, vector<32x32xf32> -> vector<32x32xf32>
    %18 = vector.broadcast %2 : vector<1x32xf32> to vector<32x32xf32>
    %19 = arith.addf %17, %18 : vector<32x32xf32>
    %20 = arith.truncf %19 : vector<32x32xf32> to vector<32x32xbf16>
    %c0_12 = arith.constant 0 : index
    %c0_13 = arith.constant 0 : index
    %21 = vector.load %arg4[%c0_12, %c0_13] : memref<32x64xbf16, #tpu.memory_space<vmem>>, vector<32x64xbf16>
    %cst_14 = arith.constant dense<0.000000e+00> : vector<32x64xf32>
    %22 = tpu.matmul %20, %21, %cst_14 {dimension_numbers = #tpu.dot_dimension_numbers<[1], [0], [0], [1], [0, 0, 1, 1], [], []>} : vector<32x32xbf16>, vector<32x64xbf16>, vector<32x64xf32> -> vector<32x64xf32>
    %23 = vector.broadcast %6 : vector<1x64xf32> to vector<32x64xf32>
    %24 = arith.addf %22, %23 : vector<32x64xf32>
    %c0_15 = arith.constant 0 : index
    %c0_16 = arith.constant 0 : index
    %25 = vector.load %arg5[%c0_15, %c0_16] : memref<64x1xf32, #tpu.memory_space<vmem>>, vector<64x1xf32>
    %cst_17 = arith.constant dense<0.000000e+00> : vector<32x1xf32>
    %26 = tpu.matmul %24, %25, %cst_17 {dimension_numbers = #tpu.dot_dimension_numbers<[1], [0], [0], [1], [0, 0, 1, 1], [], []>} : vector<32x64xf32>, vector<64x1xf32>, vector<32x1xf32> -> vector<32x1xf32>
    %27 = vector.shape_cast %26 : vector<32x1xf32> to vector<2x16x1xf32>
    %cst_18 = arith.constant dense<0xFF800000> : vector<2x1xf32>
    %28 = vector.multi_reduction <maximumf>, %27, %cst_18 [1] : vector<2x16x1xf32> to vector<2x1xf32>
    %29 = vector.shape_cast %28 : vector<2x1xf32> to vector<2x1x1xf32>
    %30 = vector.broadcast %29 : vector<2x1x1xf32> to vector<2x16x1xf32>
    %31 = arith.subf %27, %30 : vector<2x16x1xf32>
    %32 = math.exp %31 : vector<2x16x1xf32>
    %cst_19 = arith.constant dense<0.000000e+00> : vector<2x1xf32>
    %33 = vector.multi_reduction <add>, %32, %cst_19 [1] : vector<2x16x1xf32> to vector<2x1xf32>
    %34 = vector.shape_cast %33 : vector<2x1xf32> to vector<2x1x1xf32>
    %35 = tpu.reciprocal %34 {approx = true} : vector<2x1x1xf32> -> vector<2x1x1xf32>
    %36 = vector.broadcast %35 : vector<2x1x1xf32> to vector<2x16x1xf32>
    %37 = arith.mulf %32, %36 : vector<2x16x1xf32>
    %38 = vector.extract_strided_slice %24 {offsets = [0, 32], sizes = [32, 32], strides = [1, 1]} : vector<32x64xf32> to vector<32x32xf32>
    %39 = vector.shape_cast %38 : vector<32x32xf32> to vector<2x16x32xf32>
    %40 = vector.broadcast %37 : vector<2x16x1xf32> to vector<2x16x32xf32>
    %41 = arith.mulf %40, %39 : vector<2x16x32xf32>
    %cst_20 = arith.constant dense<0.000000e+00> : vector<2x32xf32>
    %42 = vector.multi_reduction <add>, %41, %cst_20 [1] : vector<2x16x32xf32> to vector<2x32xf32>
    %43 = vector.shape_cast %42 : vector<2x32xf32> to vector<2x1x32xf32>
    %44 = vector.shape_cast %5 : vector<1x32xf32> to vector<1x1x32xf32>
    %45 = vector.broadcast %44 : vector<1x1x32xf32> to vector<2x1x32xf32>
    %46 = arith.addf %45, %43 : vector<2x1x32xf32>
    %47 = vector.shape_cast %46 : vector<2x1x32xf32> to vector<2x32xf32>
    %48 = arith.truncf %47 : vector<2x32xf32> to vector<2x32xbf16>
    %c1 = arith.constant 1 : index
    %c0_21 = arith.constant 0 : index
    %c0_22 = arith.constant 0 : index
    %49 = vector.load %arg3[%c1, %c0_21, %c0_22] : memref<3x32x32xbf16, #tpu.memory_space<vmem>>, vector<1x32x32xbf16>
    %50 = vector.shape_cast %49 : vector<1x32x32xbf16> to vector<32x32xbf16>
    %cst_23 = arith.constant dense<0.000000e+00> : vector<2x32xf32>
    %51 = tpu.matmul %48, %50, %cst_23 {dimension_numbers = #tpu.dot_dimension_numbers<[1], [0], [0], [1], [0, 0, 1, 1], [], []>} : vector<2x32xbf16>, vector<32x32xbf16>, vector<2x32xf32> -> vector<2x32xf32>
    %52 = vector.broadcast %3 : vector<1x32xf32> to vector<2x32xf32>
    %53 = arith.addf %51, %52 : vector<2x32xf32>
    %cst_24 = arith.constant 0.000000e+00 : f32
    %54 = vector.broadcast %cst_24 : f32 to vector<2x32xf32>
    %55 = arith.maximumf %53, %54 : vector<2x32xf32>
    %56 = arith.addf %47, %55 : vector<2x32xf32>
    %57 = arith.truncf %56 : vector<2x32xf32> to vector<2x32xbf16>
    %c2 = arith.constant 2 : index
    %c0_25 = arith.constant 0 : index
    %c0_26 = arith.constant 0 : index
    %58 = vector.load %arg3[%c2, %c0_25, %c0_26] : memref<3x32x32xbf16, #tpu.memory_space<vmem>>, vector<1x32x32xbf16>
    %59 = vector.shape_cast %58 : vector<1x32x32xbf16> to vector<32x32xbf16>
    %cst_27 = arith.constant dense<0.000000e+00> : vector<2x32xf32>
    %60 = tpu.matmul %57, %59, %cst_27 {dimension_numbers = #tpu.dot_dimension_numbers<[1], [0], [0], [1], [0, 0, 1, 1], [], []>} : vector<2x32xbf16>, vector<32x32xbf16>, vector<2x32xf32> -> vector<2x32xf32>
    %61 = vector.broadcast %4 : vector<1x32xf32> to vector<2x32xf32>
    %62 = arith.addf %60, %61 : vector<2x32xf32>
    %63 = vector.shape_cast %62 : vector<2x32xf32> to vector<2x1x32xf32>
    %cst_28 = arith.constant dense<0.000000e+00> : vector<1x32xf32>
    %64 = vector.multi_reduction <add>, %63, %cst_28 [0] : vector<2x1x32xf32> to vector<1x32xf32>
    %c0_29 = arith.constant 0 : index
    %c0_30 = arith.constant 0 : index
    %c0_31 = arith.constant 0 : index
    %65 = vector.load %arg8[%c0_29, %c0_30, %c0_31] : memref<1x1x32xf32, #tpu.memory_space<vmem>>, vector<1x1x32xf32>
    %66 = vector.shape_cast %65 : vector<1x1x32xf32> to vector<1x32xf32>
    %67 = vector.shape_cast %64 : vector<1x32xf32> to vector<1x1x32xf32>
    tpu.vector_store %arg8[%c0_29, %c0_30, %c0_31], %67 {strides = array<i32>} : memref<1x1x32xf32, #tpu.memory_space<vmem>>, vector<1x1x32xf32>,
    return
  }
  func.func @transform_0(%arg0: i32) -> (i32, i32) {
    %c0_i32 = arith.constant 0 : i32
    %c0_i32_0 = arith.constant 0 : i32
    return %arg0, %c0_i32 : i32, i32
  }
  func.func @transform_1(%arg0: i32) -> (i32, i32) {
    %c0_i32 = arith.constant 0 : i32
    %c0_i32_0 = arith.constant 0 : i32
    %c0_i32_1 = arith.constant 0 : i32
    return %c0_i32, %c0_i32_0 : i32, i32
  }
  func.func @transform_2(%arg0: i32) -> (i32, i32, i32) {
    %c0_i32 = arith.constant 0 : i32
    %c0_i32_0 = arith.constant 0 : i32
    %c0_i32_1 = arith.constant 0 : i32
    %c0_i32_2 = arith.constant 0 : i32
    return %c0_i32, %c0_i32_0, %c0_i32_1 : i32, i32, i32
  }
  func.func @transform_3(%arg0: i32) -> (i32, i32) {
    %c0_i32 = arith.constant 0 : i32
    %c0_i32_0 = arith.constant 0 : i32
    %c0_i32_1 = arith.constant 0 : i32
    return %c0_i32, %c0_i32_0 : i32, i32
  }
  func.func @transform_4(%arg0: i32) -> (i32, i32) {
    %c0_i32 = arith.constant 0 : i32
    %c0_i32_0 = arith.constant 0 : i32
    %c0_i32_1 = arith.constant 0 : i32
    return %c0_i32, %c0_i32_0 : i32, i32
  }
  func.func @transform_5(%arg0: i32) -> (i32, i32) {
    %c0_i32 = arith.constant 0 : i32
    %c0_i32_0 = arith.constant 0 : i32
    %c0_i32_1 = arith.constant 0 : i32
    return %c0_i32, %c0_i32_0 : i32, i32
  }
  func.func @transform_6(%arg0: i32) -> (i32, i32) {
    %c0_i32 = arith.constant 0 : i32
    %c0_i32_0 = arith.constant 0 : i32
    %c0_i32_1 = arith.constant 0 : i32
    return %c0_i32, %c0_i32_0 : i32, i32
  }
  func.func @transform_7(%arg0: i32) -> (i32, i32, i32) {
    %c0_i32 = arith.constant 0 : i32
    %c0_i32_0 = arith.constant 0 : i32
    %c0_i32_1 = arith.constant 0 : i32
    return %arg0, %c0_i32, %c0_i32_0 : i32, i32, i32
  }
}

</mosaic_0001>

<llo_original>
// kernel: tpu_custom_call.1
$region0: #{tpu_custom_call.1}
  #allocation0 [shape = 'u32[]', space=smem, size = 0x4, offset = 0x4, fixed_abs, tag = 'smem constant byte address 0x4 - core index']
  #allocation1 [shape = 'u32[144,128]{1,0:T(1,128)}', space=vmem, size = 0x12000, scoped, tag = 'internal scratch']
  %s0 = inlined_call_operand.vmem [shape: bf16[64,8], index: 0, kind: input, shape index: {}]
  %s1 = inlined_call_operand.vmem [shape: bf16[8,32], index: 1, kind: input, shape index: {}]
  %s2 = inlined_call_operand.vmem [shape: bf16[3,32,32], index: 2, kind: input, shape index: {}]
  %s3 = inlined_call_operand.vmem [shape: bf16[32,64], index: 3, kind: input, shape index: {}]
  %s4 = inlined_call_operand.vmem [shape: f32[64,1], index: 4, kind: input, shape index: {}]
  %s5 = inlined_call_operand.vmem [shape: f32[5,32], index: 5, kind: input, shape index: {}]
  %s6 = inlined_call_operand.vmem [shape: f32[1,64], index: 6, kind: input, shape index: {}]
  %s7 = inlined_call_operand.hbm [shape: f32[2,1,32], index: 7, kind: output, shape index: {}]
  %s8 = sld [smem:[#allocation0]]
  $region61: #{tpu_custom_call.1} parent=0
    _
  %s10 = ssub.s32 1, %s8
  %s11 = scalar_select 0, %s10, %s8
  $region1: #{tpu_custom_call.1} parent=0
    #allocation2 [shape = 'u8[1024]{0}', space=vmem, size = 0x400, scoped, tag = 'output window, operand 0']
    #allocation3 [shape = 's32[2]{0}', space=sflag, size = 0x8, scoped, tag = 'scoped memory for tpu_custom_call.1']
    %12 = vsyncpa [#allocation3], 0
    %s13 = scalar_lea.sflag [#allocation3], 1
    %14 = vsyncpa %s13, 0
    loop: start=0, step=1, limit=4
    $region2: #{tpu_custom_call.1} parent=1 // loop_pre_header
      _
    $region3: #{tpu_custom_call.1} parent=1 // loop_header
      %s16 = sphi 0, %s20
      %p17 = scmp.ge.s32.totalorder %s16, 4
      %s26 = sphi 0, %s28
      %s29 = sphi 0, %s26
      %s30 = sphi 0, %s29
      %s46 = sphi 0, %s30
      %s50 = sphi 0, %s50
      %s52 = sphi 0, %s50
      %s53 = sphi 0, %s52
      %s67 = sphi 0, %s53
      %s71 = sphi 0, %s71
      %s73 = sphi 0, %s71
      %s74 = sphi 0, %s73
      %s88 = sphi 0, %s74
      %s92 = sphi 0, %s92
      %s94 = sphi 0, %s92
      %s95 = sphi 0, %s94
      %s109 = sphi 0, %s95
      %s113 = sphi 0, %s113
      %s115 = sphi 0, %s113
      %s116 = sphi 0, %s115
      %s130 = sphi 0, %s116
      %s134 = sphi 0, %s134
      %s136 = sphi 0, %s134
      %s137 = sphi 0, %s136
      %s151 = sphi 0, %s137
      %s155 = sphi 0, %s155
      %s157 = sphi 0, %s155
      %s158 = sphi 0, %s157
      %s172 = sphi 0, %s158
      %s178 = sphi 0, %s180
      %s181 = sphi 0, %s178
      %s182 = sphi 0, %s181
      %s198 = sphi 0, %s182
    $region4: #{tpu_custom_call.1} parent=1 // loop_header_branch
      %19 = sbr.rel (%p17) target = $region8
    $region5: #{tpu_custom_call.1} parent=1 // loop_body
      %s21 = ssub.s32 %s16, 1
      %s22 = ssub.s32 %s16, 2
      %s23 = sadd.s32 %s16, 1
      %s24 = ssub.s32 %s16, %s23
      %p25 = scmp.eq.s32.totalorder %s24, 0
      %s27 = sadd.s32 %s26, 1
      %s28 = scalar_select %p25, %s26, %s27
      %p31 = pneg %p25
      %p32 = scmp.eq.s32.totalorder %s16, 1
      %p33 = por %p31, %p32
      %p34 = scmp.ne.s32.totalorder %s26, %s29
      %p35 = scmp.eq.s32.totalorder %s16, 0
      %p36 = por %p34, %p35
      %p37 = scmp.ne.s32.totalorder %s26, %s29
      %p38 = scmp.eq.s32.totalorder %s21, 1
      %p39 = por %p37, %p38
      %p40 = scmp.ne.s32.totalorder %s29, %s30
      %p41 = scmp.eq.s32.totalorder %s21, 0
      %p42 = por %p40, %p41
      %p43 = scmp.ne.s32.totalorder %s29, %s30
      %p44 = scmp.eq.s32.totalorder %s22, 1
      %p45 = por %p43, %p44
      %p47 = scmp.ne.s32.totalorder %s30, %s46
      %p48 = scmp.eq.s32.totalorder %s22, 0
      %p49 = por %p47, %p48
      %s51 = sadd.s32 %s50, 1
      %p54 = scmp.eq.s32.totalorder %s16, 1
      %p55 = scmp.ne.s32.totalorder %s50, %s52
      %p56 = scmp.eq.s32.totalorder %s16, 0
      %p57 = por %p55, %p56
      %p58 = scmp.ne.s32.totalorder %s50, %s52
      %p59 = scmp.eq.s32.totalorder %s21, 1
      %p60 = por %p58, %p59
      %p61 = scmp.ne.s32.totalorder %s52, %s53
      %p62 = scmp.eq.s32.totalorder %s21, 0
      %p63 = por %p61, %p62
      %p64 = scmp.ne.s32.totalorder %s52, %s53
      %p65 = scmp.eq.s32.totalorder %s22, 1
      %p66 = por %p64, %p65
      %p68 = scmp.ne.s32.totalorder %s53, %s67
      %p69 = scmp.eq.s32.totalorder %s22, 0
      %p70 = por %p68, %p69
      %s72 = sadd.s32 %s71, 1
      %p75 = scmp.eq.s32.totalorder %s16, 1
      %p76 = scmp.ne.s32.totalorder %s71, %s73
      %p77 = scmp.eq.s32.totalorder %s16, 0
      %p78 = por %p76, %p77
      %p79 = scmp.ne.s32.totalorder %s71, %s73
      %p80 = scmp.eq.s32.totalorder %s21, 1
      %p81 = por %p79, %p80
      %p82 = scmp.ne.s32.totalorder %s73, %s74
      %p83 = scmp.eq.s32.totalorder %s21, 0
      %p84 = por %p82, %p83
      %p85 = scmp.ne.s32.totalorder %s73, %s74
      %p86 = scmp.eq.s32.totalorder %s22, 1
      %p87 = por %p85, %p86
      %p89 = scmp.ne.s32.totalorder %s74, %s88
      %p90 = scmp.eq.s32.totalorder %s22, 0
      %p91 = por %p89, %p90
      %s93 = sadd.s32 %s92, 1
      %p96 = scmp.eq.s32.totalorder %s16, 1
      %p97 = scmp.ne.s32.totalorder %s92, %s94
      %p98 = scmp.eq.s32.totalorder %s16, 0
      %p99 = por %p97, %p98
      %p100 = scmp.ne.s32.totalorder %s92, %s94
      %p101 = scmp.eq.s32.totalorder %s21, 1
      %p102 = por %p100, %p101
      %p103 = scmp.ne.s32.totalorder %s94, %s95
      %p104 = scmp.eq.s32.totalorder %s21, 0
      %p105 = por %p103, %p104
      %p106 = scmp.ne.s32.totalorder %s94, %s95
      %p107 = scmp.eq.s32.totalorder %s22, 1
      %p108 = por %p106, %p107
      %p110 = scmp.ne.s32.totalorder %s95, %s109
      %p111 = scmp.eq.s32.totalorder %s22, 0
      %p112 = por %p110, %p111
      %s114 = sadd.s32 %s113, 1
      %p117 = scmp.eq.s32.totalorder %s16, 1
      %p118 = scmp.ne.s32.totalorder %s113, %s115
      %p119 = scmp.eq.s32.totalorder %s16, 0
      %p120 = por %p118, %p119
      %p121 = scmp.ne.s32.totalorder %s113, %s115
      %p122 = scmp.eq.s32.totalorder %s21, 1
      %p123 = por %p121, %p122
      %p124 = scmp.ne.s32.totalorder %s115, %s116
      %p125 = scmp.eq.s32.totalorder %s21, 0
      %p126 = por %p124, %p125
      %p127 = scmp.ne.s32.totalorder %s115, %s116
      %p128 = scmp.eq.s32.totalorder %s22, 1
      %p129 = por %p127, %p128
      %p131 = scmp.ne.s32.totalorder %s116, %s130
      %p132 = scmp.eq.s32.totalorder %s22, 0
      %p133 = por %p131, %p132
      %s135 = sadd.s32 %s134, 1
      %p138 = scmp.eq.s32.totalorder %s16, 1
      %p139 = scmp.ne.s32.totalorder %s134, %s136
      %p140 = scmp.eq.s32.totalorder %s16, 0
      %p141 = por %p139, %p140
      %p142 = scmp.ne.s32.totalorder %s134, %s136
      %p143 = scmp.eq.s32.totalorder %s21, 1
      %p144 = por %p142, %p143
      %p145 = scmp.ne.s32.totalorder %s136, %s137
      %p146 = scmp.eq.s32.totalorder %s21, 0
      %p147 = por %p145, %p146
      %p148 = scmp.ne.s32.totalorder %s136, %s137
      %p149 = scmp.eq.s32.totalorder %s22, 1
      %p150 = por %p148, %p149
      %p152 = scmp.ne.s32.totalorder %s137, %s151
      %p153 = scmp.eq.s32.totalorder %s22, 0
      %p154 = por %p152, %p153
      %s156 = sadd.s32 %s155, 1
      %p159 = scmp.eq.s32.totalorder %s16, 1
      %p160 = scmp.ne.s32.totalorder %s155, %s157
      %p161 = scmp.eq.s32.totalorder %s16, 0
      %p162 = por %p160, %p161
      %p163 = scmp.ne.s32.totalorder %s155, %s157
      %p164 = scmp.eq.s32.totalorder %s21, 1
      %p165 = por %p163, %p164
      %p166 = scmp.ne.s32.totalorder %s157, %s158
      %p167 = scmp.eq.s32.totalorder %s21, 0
      %p168 = por %p166, %p167
      %p169 = scmp.ne.s32.totalorder %s157, %s158
      %p170 = scmp.eq.s32.totalorder %s22, 1
      %p171 = por %p169, %p170
      %p173 = scmp.ne.s32.totalorder %s158, %s172
      %p174 = scmp.eq.s32.totalorder %s22, 0
      %p175 = por %p173, %p174
      %s176 = ssub.s32 %s16, %s23
      %p177 = scmp.eq.s32.totalorder %s176, 0
      %s179 = sadd.s32 %s178, 1
      %s180 = scalar_select %p177, %s178, %s179
      %p183 = pneg %p177
      %p184 = scmp.eq.s32.totalorder %s16, 1
      %p185 = por %p183, %p184
      %p186 = scmp.ne.s32.totalorder %s178, %s181
      %p187 = scmp.eq.s32.totalorder %s16, 0
      %p188 = por %p186, %p187
      %p189 = scmp.ne.s32.totalorder %s178, %s181
      %p190 = scmp.eq.s32.totalorder %s21, 1
      %p191 = por %p189, %p190
      %p192 = scmp.ne.s32.totalorder %s181, %s182
      %p193 = scmp.eq.s32.totalorder %s21, 0
      %p194 = por %p192, %p193
      %p195 = scmp.ne.s32.totalorder %s181, %s182
      %p196 = scmp.eq.s32.totalorder %s22, 1
      %p197 = por %p195, %p196
      %p199 = scmp.ne.s32.totalorder %s182, %s198
      %p200 = scmp.eq.s32.totalorder %s22, 0
      %p201 = por %p199, %p200
      %p202 = scmp.le.s32.totalorder 1, %s16
      %p203 = scmp.lt.s32.totalorder %s16, 3
      %p204 = pnand %p202, %p203
      %p205 = pneg %p204
      // Predicated region
      $region9: #{tpu_custom_call.1} parent=5 // pred_check
        _
      $region10: #{tpu_custom_call.1} parent=5 // pred_check_branch
        %207 = sbr.rel (%p204) target = $region12
      $region11: #{tpu_custom_call.1} parent=5 // pred_region
        %s208 = ssub.s32 %s16, 1
        // Predicated region
        $region13: #{tpu_custom_call.1} parent=11 // pred_check
          %p209 = pneg %p63
        $region14: #{tpu_custom_call.1} parent=11 // pred_check_branch
          %211 = sbr.rel (%p209) target = $region16
        $region15: #{tpu_custom_call.1} parent=11 // pred_region
          _
        $region16: #{tpu_custom_call.1} parent=11 // pred_fallthru
          _
        // Predicated region
        $region17: #{tpu_custom_call.1} parent=11 // pred_check
          %p212 = pneg %p84
        $region18: #{tpu_custom_call.1} parent=11 // pred_check_branch
          %214 = sbr.rel (%p212) target = $region20
        $region19: #{tpu_custom_call.1} parent=11 // pred_region
          _
        $region20: #{tpu_custom_call.1} parent=11 // pred_fallthru
          _
        // Predicated region
        $region21: #{tpu_custom_call.1} parent=11 // pred_check
          %p215 = pneg %p105
        $region22: #{tpu_custom_call.1} parent=11 // pred_check_branch
          %217 = sbr.rel (%p215) target = $region24
        $region23: #{tpu_custom_call.1} parent=11 // pred_region
          _
        $region24: #{tpu_custom_call.1} parent=11 // pred_fallthru
          _
        // Predicated region
        $region25: #{tpu_custom_call.1} parent=11 // pred_check
          %p218 = pneg %p126
        $region26: #{tpu_custom_call.1} parent=11 // pred_check_branch
          %220 = sbr.rel (%p218) target = $region28
        $region27: #{tpu_custom_call.1} parent=11 // pred_region
          _
        $region28: #{tpu_custom_call.1} parent=11 // pred_fallthru
          _
        // Predicated region
        $region29: #{tpu_custom_call.1} parent=11 // pred_check
          %p221 = pneg %p147
        $region30: #{tpu_custom_call.1} parent=11 // pred_check_branch
          %223 = sbr.rel (%p221) target = $region32
        $region31: #{tpu_custom_call.1} parent=11 // pred_region
          _
        $region32: #{tpu_custom_call.1} parent=11 // pred_fallthru
          _
        // Predicated region
        $region33: #{tpu_custom_call.1} parent=11 // pred_check
          %p224 = pneg %p168
        $region34: #{tpu_custom_call.1} parent=11 // pred_check_branch
          %226 = sbr.rel (%p224) target = $region36
        $region35: #{tpu_custom_call.1} parent=11 // pred_region
          _
        $region36: #{tpu_custom_call.1} parent=11 // pred_fallthru
          _
      $region12: #{tpu_custom_call.1} parent=5 // pred_fallthru
        _
      %p227 = scmp.lt.s32.totalorder %s16, 2
      // Predicated region
      $region37: #{tpu_custom_call.1} parent=5 // pred_check
        %p228 = pneg %p227
      $region38: #{tpu_custom_call.1} parent=5 // pred_check_branch
        %230 = sbr.rel (%p228) target = $region40
      $region39: #{tpu_custom_call.1} parent=5 // pred_region
        // Predicated region
        $region41: #{tpu_custom_call.1} parent=39 // pred_check
          %p231 = pneg %p36
        $region42: #{tpu_custom_call.1} parent=39 // pred_check_branch
          %233 = sbr.rel (%p231) target = $region44
        $region43: #{tpu_custom_call.1} parent=39 // pred_region
          %s234 = smul.u32 4, %s16
          %p235 = scmp.lt.s32.totalorder %s234, 7
          %s236 = scalar_select %p235, %s234, 7
          %s237 = smul.addr %s236, 4
          %s238 = scalar_lea.vmem %s0, %s237
          %s239 = smul.u32 4, %s16
        $region44: #{tpu_custom_call.1} parent=39 // pred_fallthru
          _
      $region40: #{tpu_custom_call.1} parent=5 // pred_fallthru
        _
      %p240 = scmp.le.s32.totalorder 1, %s16
      %p241 = scmp.lt.s32.totalorder %s16, 3
      %p242 = pnand %p240, %p241
      %p243 = pneg %p242
      // Predicated region
      $region45: #{tpu_custom_call.1} parent=5 // pred_check
        _
      $region46: #{tpu_custom_call.1} parent=5 // pred_check_branch
        %245 = sbr.rel (%p242) target = $region48
      $region47: #{tpu_custom_call.1} parent=5 // pred_region
        %s246 = ssub.s32 %s16, 1
        %s247 = smul.u32 4, %s21
        %p248 = scmp.lt.s32.totalorder %s247, 7
        %s249 = scalar_select %p248, %s247, 7
        %s250 = smul.addr %s249, 4
        %s251 = scalar_lea.vmem %s0, %s250
        %p252 = pneg %p42
        %p253 = pneg %p39
        %p254 = pneg %p63
        %p255 = pneg %p60
        %p256 = pneg %p84
        %p257 = pneg %p81
        %p258 = pneg %p105
        %p259 = pneg %p102
        %p260 = pneg %p126
        %p261 = pneg %p123
        %p262 = pneg %p147
        %p263 = pneg %p144
        %p264 = pneg %p168
        %p265 = pneg %p165
        %p266 = pneg %p194
        %p267 = pneg %p191
        %s268 = sand.u32 %s181, 1
        %s269 = scalar_lea.sflag [#allocation3], %s268
        %s270 = sand.u32 %s181, 1
        %s271 = scalar_lea.vmem [#allocation2], %s270
        %s272 = smul.u32 4, %s21
        %p273 = scmp.lt.s32.totalorder %s272, 7
        %s274 = scalar_select %p273, %s272, 7
        %s275 = smul.addr %s274, 4
        %s276 = scalar_lea.vmem %s0, %s275
        %s277 = smul.u32 4, %s21
        %v279 = vld [vmem:[%s5] sm:$0x1f]
        %v280 = vld [vmem:[%s6] sm:$0x1]
        %v281 = vld [vmem:[%s276] sm:$0xf]
        %v282 = vld [vmem:[%s276 + $0x4] sm:$0xf]
        %v283 = vld [vmem:[%s276 + $0x8] sm:$0xf]
        %v284 = vld [vmem:[%s276 + $0xc] sm:$0xf]
        %v285 = vld [vmem:[%s1] sm:$0xf]
        %v286 = vlaneseq
        %v287 = vshrl.u32 %v286, 7
        %v288 = vsub.s32 0, %v287
        %v289 = vrot.slane %v279, %v288
        %v294 = vunpack.c.l.b16 %v281
        %v295 = vunpack.c.l.b16 %v282
        %v296 = vunpack.c.l.b16 %v283
        %v297 = vunpack.c.l.b16 %v284
        %v298 = vpack.c.b16 %v295, %v294
        %v299 = vpack.c.b16 %v297, %v296
        %vm300 = vcmask 64512
        %v302 = vsel %vm300, %v298, 0
        %v305 = vsel %vm300, %v299, 0
        %vm307 = vcmask 1043456
        %v309 = vsel %vm307, %v285, 0
        %311 = vmatprep.subr.bf16.mxu0 0
        %312 = vmatpush1.bf16.msra.mxu0 %v309
        %313 = vmatprep.subr.bf16.mxu0 0
        %314 = vmatpush1.bf16.msra.mxu0 0
        %315 = vmatprep.subr.bf16.mxu0 0
        %316 = vmatpush1.bf16.msra.mxu0 0
        %317 = vmatprep.subr.bf16.mxu0 0
        %318 = vmatpush1.bf16.msra.mxu0 0
        %319 = vmatprep.subr.bf16.mxu0 0
        %320 = vmatpush1.bf16.msra.mxu0 0
        %321 = vmatprep.subr.bf16.mxu0 0
        %322 = vmatpush1.bf16.msra.mxu0 0
        %323 = vmatprep.subr.bf16.mxu0 0
        %324 = vmatpush1.bf16.msra.mxu0 0
        %325 = vmatprep.subr.bf16.mxu0 0
        %326 = vmatpush1.bf16.msra.mxu0 0
        %327 = vmatprep.subr.bf16.mxu0 0
        %328 = vmatpush1.bf16.msra.mxu0 0
        %329 = vmatprep.subr.bf16.mxu0 0
        %330 = vmatpush1.bf16.msra.mxu0 0
        %331 = vmatprep.subr.bf16.mxu0 0
        %332 = vmatpush1.bf16.msra.mxu0 0
        %333 = vmatprep.subr.bf16.mxu0 0
        %334 = vmatpush1.bf16.msra.mxu0 0
        %335 = vmatprep.subr.bf16.mxu0 0
        %336 = vmatpush1.bf16.msra.mxu0 0
        %337 = vmatprep.subr.bf16.mxu0 0
        %338 = vmatpush1.bf16.msra.mxu0 0
        %339 = vmatprep.subr.bf16.mxu0 0
        %340 = vmatpush1.bf16.msra.mxu0 0
        %341 = vmatprep.subr.bf16.mxu0 0
        %342 = vmatpush1.bf16.msra.mxu0 0
        %343 = vmatprep.mubr.bf16.mxu0 0
        %344 = vmatmul.mubr.bf16.gmra.mrb[0].mxu0 %v302
        %v345 = vpop.f32.mrb[0].mxu0
        %v346 = vadd.f32 %v289, %v345
        %v347 = vpop.f32.mrb[0].mxu0
        %v348 = vpop.f32.mrb[0].mxu0
        %v349 = vadd.f32 %v289, %v348
        %v350 = vpop.f32.mrb[0].mxu0
        %351 = vmatprep.mubr.bf16.mxu0 0
        %352 = vmatmul.mubr.bf16.gmra.mrb[0].mxu0 %v305
        %v353 = vpop.f32.mrb[0].mxu0
        %v354 = vadd.f32 %v289, %v353
        %v355 = vpop.f32.mrb[0].mxu0
        %v356 = vpop.f32.mrb[0].mxu0
        %v357 = vadd.f32 %v289, %v356
        %v358 = vpop.f32.mrb[0].mxu0
        %359 = vdwg.mxu0
        %v360 = vmax.f32 %v346, 0.0
        %v361 = vmax.f32 %v349, 0.0
        %v362 = vmax.f32 %v354, 0.0
        %v363 = vmax.f32 %v357, 0.0
        %v364 = vpack.c.bf16 %v361, %v360
        %v365 = vpack.c.bf16 %v363, %v362
        %v366 = vld [vmem:[%s2] sm:$0xf]
        %v367 = vld [vmem:[%s2 + $0x4] sm:$0xf]
        %v368 = vld [vmem:[%s2 + $0x8] sm:$0xf]
        %v369 = vld [vmem:[%s2 + $0xc] sm:$0xf]
        %v370 = vlaneseq
        %v371 = vshrl.u32 %v370, 7
        %v372 = vsub.s32 1, %v371
        %v373 = vrot.slane %v279, %v372
        %v378 = vunpack.c.l.b16 %v366
        %v379 = vunpack.c.l.b16 %v367
        %v380 = vunpack.c.l.b16 %v368
        %v381 = vunpack.c.l.b16 %v369
        %v382 = vpack.c.b16 %v379, %v378
        %v383 = vpack.c.b16 %v381, %v380
        %vm386 = vcmask 261120
        %v388 = vsel %vm386, %v364, 0
        %v391 = vsel %vm386, %v365, 0
        %393 = vmatprep.subr.bf16.mxu0 0
        %394 = vmatpush1.bf16.msra.mxu0 %v382
        %395 = vmatprep.subr.bf16.mxu0 0
        %396 = vmatpush1.bf16.msra.mxu0 %v383
        %397 = vmatprep.subr.bf16.mxu0 0
        %398 = vmatpush1.bf16.msra.mxu0 0
        %399 = vmatprep.subr.bf16.mxu0 0
        %400 = vmatpush1.bf16.msra.mxu0 0
        %401 = vmatprep.subr.bf16.mxu0 0
        %402 = vmatpush1.bf16.msra.mxu0 0
        %403 = vmatprep.subr.bf16.mxu0 0
        %404 = vmatpush1.bf16.msra.mxu0 0
        %405 = vmatprep.subr.bf16.mxu0 0
        %406 = vmatpush1.bf16.msra.mxu0 0
        %407 = vmatprep.subr.bf16.mxu0 0
        %408 = vmatpush1.bf16.msra.mxu0 0
        %409 = vmatprep.subr.bf16.mxu0 0
        %410 = vmatpush1.bf16.msra.mxu0 0
        %411 = vmatprep.subr.bf16.mxu0 0
        %412 = vmatpush1.bf16.msra.mxu0 0
        %413 = vmatprep.subr.bf16.mxu0 0
        %414 = vmatpush1.bf16.msra.mxu0 0
        %415 = vmatprep.subr.bf16.mxu0 0
        %416 = vmatpush1.bf16.msra.mxu0 0
        %417 = vmatprep.subr.bf16.mxu0 0
        %418 = vmatpush1.bf16.msra.mxu0 0
        %419 = vmatprep.subr.bf16.mxu0 0
        %420 = vmatpush1.bf16.msra.mxu0 0
        %421 = vmatprep.subr.bf16.mxu0 0
        %422 = vmatpush1.bf16.msra.mxu0 0
        %423 = vmatprep.subr.bf16.mxu0 0
        %424 = vmatpush1.bf16.msra.mxu0 0
        %425 = vmatprep.mubr.bf16.mxu0 0
        %426 = vmatmul.mubr.bf16.gmra.mrb[0].mxu0 %v388
        %v427 = vpop.f32.mrb[0].mxu0
        %v428 = vadd.f32 %v373, %v427
        %v429 = vpop.f32.mrb[0].mxu0
        %v430 = vpop.f32.mrb[0].mxu0
        %v431 = vadd.f32 %v373, %v430
        %v432 = vpop.f32.mrb[0].mxu0
        %433 = vmatprep.mubr.bf16.mxu0 0
        %434 = vmatmul.mubr.bf16.gmra.mrb[0].mxu0 %v391
        %v435 = vpop.f32.mrb[0].mxu0
        %v436 = vadd.f32 %v373, %v435
        %v437 = vpop.f32.mrb[0].mxu0
        %v438 = vpop.f32.mrb[0].mxu0
        %v439 = vadd.f32 %v373, %v438
        %v440 = vpop.f32.mrb[0].mxu0
        %441 = vdwg.mxu0
        %v442 = vpack.c.bf16 %v431, %v428
        %v443 = vpack.c.bf16 %v439, %v436
        %v444 = vld [vmem:[%s3] sm:$0xf]
        %v445 = vld [vmem:[%s3 + $0x4] sm:$0xf]
        %v446 = vld [vmem:[%s3 + $0x8] sm:$0xf]
        %v447 = vld [vmem:[%s3 + $0xc] sm:$0xf]
        %v449 = vlaneseq
        %v450 = vshrl.u32 %v449, 7
        %v451 = vsub.s32 0, %v450
        %v452 = vrot.slane %v280, %v451
        %v458 = vunpack.c.l.b16 %v444
        %v459 = vunpack.c.l.b16 %v445
        %v460 = vunpack.c.l.b16 %v446
        %v461 = vunpack.c.l.b16 %v447
        %v462 = vpack.c.b16 %v459, %v458
        %v463 = vpack.c.b16 %v461, %v460
        %v467 = vsel %vm386, %v442, 0
        %v470 = vsel %vm386, %v443, 0
        %472 = vmatprep.subr.bf16.mxu0 0
        %473 = vmatpush1.bf16.msra.mxu0 %v462
        %474 = vmatprep.subr.bf16.mxu0 0
        %475 = vmatpush1.bf16.msra.mxu0 %v463
        %476 = vmatprep.subr.bf16.mxu0 0
        %477 = vmatpush1.bf16.msra.mxu0 0
        %478 = vmatprep.subr.bf16.mxu0 0
        %479 = vmatpush1.bf16.msra.mxu0 0
        %480 = vmatprep.subr.bf16.mxu0 0
        %481 = vmatpush1.bf16.msra.mxu0 0
        %482 = vmatprep.subr.bf16.mxu0 0
        %483 = vmatpush1.bf16.msra.mxu0 0
        %484 = vmatprep.subr.bf16.mxu0 0
        %485 = vmatpush1.bf16.msra.mxu0 0
        %486 = vmatprep.subr.bf16.mxu0 0
        %487 = vmatpush1.bf16.msra.mxu0 0
        %488 = vmatprep.subr.bf16.mxu0 0
        %489 = vmatpush1.bf16.msra.mxu0 0
        %490 = vmatprep.subr.bf16.mxu0 0
        %491 = vmatpush1.bf16.msra.mxu0 0
        %492 = vmatprep.subr.bf16.mxu0 0
        %493 = vmatpush1.bf16.msra.mxu0 0
        %494 = vmatprep.subr.bf16.mxu0 0
        %495 = vmatpush1.bf16.msra.mxu0 0
        %496 = vmatprep.subr.bf16.mxu0 0
        %497 = vmatpush1.bf16.msra.mxu0 0
        %498 = vmatprep.subr.bf16.mxu0 0
        %499 = vmatpush1.bf16.msra.mxu0 0
        %500 = vmatprep.subr.bf16.mxu0 0
        %501 = vmatpush1.bf16.msra.mxu0 0
        %502 = vmatprep.subr.bf16.mxu0 0
        %503 = vmatpush1.bf16.msra.mxu0 0
        %504 = vmatprep.mubr.bf16.mxu0 0
        %505 = vmatmul.mubr.bf16.gmra.mrb[0].mxu0 %v467
        %v506 = vpop.f32.mrb[0].mxu0
        %v507 = vadd.f32 %v452, %v506
        %v508 = vpop.f32.mrb[0].mxu0
        %v509 = vpop.f32.mrb[0].mxu0
        %v510 = vadd.f32 %v452, %v509
        %v511 = vpop.f32.mrb[0].mxu0
        %512 = vmatprep.mubr.bf16.mxu0 0
        %513 = vmatmul.mubr.bf16.gmra.mrb[0].mxu0 %v470
        %v514 = vpop.f32.mrb[0].mxu0
        %v515 = vadd.f32 %v452, %v514
        %v516 = vpop.f32.mrb[0].mxu0
        %v517 = vpop.f32.mrb[0].mxu0
        %v518 = vadd.f32 %v452, %v517
        %v519 = vpop.f32.mrb[0].mxu0
        %520 = vdwg.mxu0
        %v521 = vld [vmem:[%s4] sm:$0xff]
        %v522 = vld [vmem:[%s4 + $0x8] sm:$0xff]
        %v523 = vld [vmem:[%s4 + $0x10] sm:$0xff]
        %v524 = vld [vmem:[%s4 + $0x18] sm:$0xff]
        %v525 = vld [vmem:[%s4 + $0x20] sm:$0xff]
        %v526 = vld [vmem:[%s4 + $0x28] sm:$0xff]
        %v527 = vld [vmem:[%s4 + $0x30] sm:$0xff]
        %v528 = vld [vmem:[%s4 + $0x38] sm:$0xff]
        %vm529 = vcmask 523264
        %v531 = vsel %vm529, %v507, 0
        %v534 = vsel %vm529, %v510, 0
        %v537 = vsel %vm529, %v515, 0
        %v540 = vsel %vm529, %v518, 0
        %542 = vmatprep.subr.mxu0 0.0
        %543 = vmatpush1.msra.mxu0 %v521
        %544 = vmatprep.subr.mxu0 0.0
        %545 = vmatpush1.msra.mxu0 %v522
        %546 = vmatprep.subr.mxu0 0.0
        %547 = vmatpush1.msra.mxu0 %v523
        %548 = vmatprep.subr.mxu0 0.0
        %549 = vmatpush1.msra.mxu0 %v524
        %550 = vmatprep.subr.mxu0 0.0
        %551 = vmatpush1.msra.mxu0 %v525
        %552 = vmatprep.subr.mxu0 0.0
        %553 = vmatpush1.msra.mxu0 %v526
        %554 = vmatprep.subr.mxu0 0.0
        %555 = vmatpush1.msra.mxu0 %v527
        %556 = vmatprep.subr.mxu0 0.0
        %557 = vmatpush1.msra.mxu0 %v528
        %558 = vmatprep.subr.mxu0 0.0
        %559 = vmatpush1.msra.mxu0 0.0
        %560 = vmatprep.subr.mxu0 0.0
        %561 = vmatpush1.msra.mxu0 0.0
        %562 = vmatprep.subr.mxu0 0.0
        %563 = vmatpush1.msra.mxu0 0.0
        %564 = vmatprep.subr.mxu0 0.0
        %565 = vmatpush1.msra.mxu0 0.0
        %566 = vmatprep.subr.mxu0 0.0
        %567 = vmatpush1.msra.mxu0 0.0
        %568 = vmatprep.subr.mxu0 0.0
        %569 = vmatpush1.msra.mxu0 0.0
        %570 = vmatprep.subr.mxu0 0.0
        %571 = vmatpush1.msra.mxu0 0.0
        %572 = vmatprep.subr.mxu0 0.0
        %573 = vmatpush1.msra.mxu0 0.0
        %574 = vmatprep.subr.mxu0 0.0
        %575 = vmatpush1.msra.mxu0 0.0
        %576 = vmatprep.subr.mxu0 0.0
        %577 = vmatpush1.msra.mxu0 0.0
        %578 = vmatprep.subr.mxu0 0.0
        %579 = vmatpush1.msra.mxu0 0.0
        %580 = vmatprep.subr.mxu0 0.0
        %581 = vmatpush1.msra.mxu0 0.0
        %582 = vmatprep.subr.mxu0 0.0
        %583 = vmatpush1.msra.mxu0 0.0
        %584 = vmatprep.subr.mxu0 0.0
        %585 = vmatpush1.msra.mxu0 0.0
        %586 = vmatprep.subr.mxu0 0.0
        %587 = vmatpush1.msra.mxu0 0.0
        %588 = vmatprep.subr.mxu0 0.0
        %589 = vmatpush1.msra.mxu0 0.0
        %590 = vmatprep.subr.mxu0 0.0
        %591 = vmatpush1.msra.mxu0 0.0
        %592 = vmatprep.subr.mxu0 0.0
        %593 = vmatpush1.msra.mxu0 0.0
        %594 = vmatprep.subr.mxu0 0.0
        %595 = vmatpush1.msra.mxu0 0.0
        %596 = vmatprep.subr.mxu0 0.0
        %597 = vmatpush1.msra.mxu0 0.0
        %598 = vmatprep.subr.mxu0 0.0
        %599 = vmatpush1.msra.mxu0 0.0
        %600 = vmatprep.subr.mxu0 0.0
        %601 = vmatpush1.msra.mxu0 0.0
        %602 = vmatprep.subr.mxu0 0.0
        %603 = vmatpush1.msra.mxu0 0.0
        %604 = vmatprep.subr.mxu0 0.0
        %605 = vmatpush1.msra.mxu0 0.0
        %606 = vmatprep.mubr.f32.mxu0 0.0
        %607 = vmatmul.mubr.f32.gmra.mrb[0].mxu0 %v531
        %v608 = vpop.f32.mrb[0].mxu0
        %v609 = vadd.f32 0.0, %v608
        %v610 = vpop.f32.mrb[0].mxu0
        %611 = vmatprep.mubr.f32.mxu0 0.0
        %612 = vmatmul.mubr.f32.gmra.mrb[0].mxu0 %v534
        %v613 = vpop.f32.mrb[0].mxu0
        %v614 = vadd.f32 0.0, %v613
        %v615 = vpop.f32.mrb[0].mxu0
        %616 = vmatprep.mubr.f32.mxu0 0.0
        %617 = vmatmul.mubr.f32.gmra.mrb[0].mxu0 %v537
        %v618 = vpop.f32.mrb[0].mxu0
        %v619 = vadd.f32 0.0, %v618
        %v620 = vpop.f32.mrb[0].mxu0
        %621 = vmatprep.mubr.f32.mxu0 0.0
        %622 = vmatmul.mubr.f32.gmra.mrb[0].mxu0 %v540
        %v623 = vpop.f32.mrb[0].mxu0
        %v624 = vadd.f32 0.0, %v623
        %v625 = vpop.f32.mrb[0].mxu0
        %626 = vdwg.mxu0
        %vm627 = vcmask 7168
        %v628 = vsel %vm627, %v609, -inf
        %v629 = vsel %vm627, %v614, -inf
        %v630 = vmax.f32 %v628, %v629
        %v631 = vrot.slane %v630, 4
        %v632 = vmax.f32 %v630, %v631
        %v633 = vrot.slane %v632, 2
        %v634 = vmax.f32 %v632, %v633
        %v635 = vrot.slane %v634, 1
        %v636 = vmax.f32 %v634, %v635
        %v637 = vsel %vm627, %v619, -inf
        %v638 = vsel %vm627, %v624, -inf
        %v639 = vmax.f32 %v637, %v638
        %v640 = vrot.slane %v639, 4
        %v641 = vmax.f32 %v639, %v640
        %v642 = vrot.slane %v641, 2
        %v643 = vmax.f32 %v641, %v642
        %v644 = vrot.slane %v643, 1
        %v645 = vmax.f32 %v643, %v644
        %v646 = vsub.f32 %v609, %v636
        %v647 = vsub.f32 %v614, %v636
        %v648 = vsub.f32 %v619, %v645
        %v649 = vsub.f32 %v624, %v645
        %v650 = vmul.f32 %v646, 1.442695
        %v651 = vpow.pop %v650
        %v652 = vmul.f32 %v647, 1.442695
        %v653 = vpow.pop %v652
        %v654 = vmul.f32 %v648, 1.442695
        %v655 = vpow.pop %v654
        %v656 = vmul.f32 %v649, 1.442695
        %v657 = vpow.pop %v656
        %v658 = vsel %vm627, %v651, 0.0
        %v659 = vsel %vm627, %v653, 0.0
        %v660 = vadd.f32 %v658, %v659
        %v661 = vrot.slane %v660, 4
        %v662 = vadd.f32 %v660, %v661
        %v663 = vrot.slane %v662, 2
        %v664 = vadd.f32 %v662, %v663
        %v665 = vrot.slane %v664, 1
        %v666 = vadd.f32 %v664, %v665
        %v667 = vsel %vm627, %v655, 0.0
        %v668 = vsel %vm627, %v657, 0.0
        %v669 = vadd.f32 %v667, %v668
        %v670 = vrot.slane %v669, 4
        %v671 = vadd.f32 %v669, %v670
        %v672 = vrot.slane %v671, 2
        %v673 = vadd.f32 %v671, %v672
        %v674 = vrot.slane %v673, 1
        %v675 = vadd.f32 %v673, %v674
        %v676 = vrcp.pop %v666
        %v677 = vrcp.pop %v675
        %v678 = vmul.f32 %v651, %v676
        %v679 = vmul.f32 %v653, %v676
        %v680 = vmul.f32 %v655, %v677
        %v681 = vmul.f32 %v657, %v677
        %683 = vset.pattern.permute.xlu0 0
        %684 = vperm.xlu0 %683, %v678
        %v685 = vpop.permute.xlu0 %684
        %688 = vset.pattern.permute.xlu0 0
        %689 = vperm.xlu0 %688, %v679
        %v690 = vpop.permute.xlu0 %689
        %693 = vset.pattern.permute.xlu0 0
        %694 = vperm.xlu0 %693, %v680
        %v695 = vpop.permute.xlu0 %694
        %698 = vset.pattern.permute.xlu0 0
        %699 = vperm.xlu0 %698, %v681
        %v700 = vpop.permute.xlu0 %699
        %v702 = vmul.f32 %v685, %v507
        %v703 = vmul.f32 %v690, %v510
        %v704 = vmul.f32 %v695, %v515
        %v705 = vmul.f32 %v700, %v518
        %vm706 = vcmask 523520
        %v707 = vsel %vm706, %v702, 0.0
        %v708 = vsel %vm706, %v703, 0.0
        %v709 = vadd.f32 %v707, %v708
        %v710 = vrot.slane %v709, 4
        %v711 = vadd.f32 %v709, %v710
        %v712 = vrot.slane %v711, 2
        %v713 = vadd.f32 %v711, %v712
        %v714 = vrot.slane %v713, 1
        %v715 = vadd.f32 %v713, %v714
        %v716 = vsel %vm706, %v704, 0.0
        %v717 = vsel %vm706, %v705, 0.0
        %v718 = vadd.f32 %v716, %v717
        %v719 = vrot.slane %v718, 4
        %v720 = vadd.f32 %v718, %v719
        %v721 = vrot.slane %v720, 2
        %v722 = vadd.f32 %v720, %v721
        %v723 = vrot.slane %v722, 1
        %v724 = vadd.f32 %v722, %v723
        %727 = vrot.lane.b32.xlu0 %v715, 96
        %v728 = vpop.permute.xlu0 %727
        %729 = vrot.lane.b32.xlu0 %v724, 96
        %v730 = vpop.permute.xlu0 %729
        %v733 = vadd.f32 %v279, %v728
        %v734 = vadd.f32 %v279, %v730
        %v735 = vpack.c.bf16 %v733, %v733
        %v736 = vpack.c.bf16 %v734, %v734
        %s737 = scalar_lea.vmem %s2, 16
        %v738 = vld [vmem:[%s737] sm:$0xf]
        %v739 = vld [vmem:[%s737 + $0x4] sm:$0xf]
        %v740 = vld [vmem:[%s737 + $0x8] sm:$0xf]
        %v741 = vld [vmem:[%s737 + $0xc] sm:$0xf]
        %v742 = vlaneseq
        %v743 = vshrl.u32 %v742, 7
        %v744 = vsub.s32 2, %v743
        %v745 = vrot.slane %v279, %v744
        %v748 = vunpack.c.l.b16 %v735
        %v749 = vunpack.c.l.b16 %v736
        %v750 = vrot.slane %v748, 4
        %v751 = vrot.slane %v749, 3
        %vm752 = vcmask 1041409
        %v753 = vsel %vm752, %v751, %v750
        %v754 = vpack.c.b16 %v753, %v753
        %v759 = vunpack.c.l.b16 %v738
        %v760 = vunpack.c.l.b16 %v739
        %v761 = vunpack.c.l.b16 %v740
        %v762 = vunpack.c.l.b16 %v741
        %v763 = vpack.c.b16 %v760, %v759
        %v764 = vpack.c.b16 %v762, %v761
        %v768 = vsel %vm386, %v754, 0
        %770 = vmatprep.subr.bf16.mxu0 0
        %771 = vmatpush1.bf16.msra.mxu0 %v763
        %772 = vmatprep.subr.bf16.mxu0 0
        %773 = vmatpush1.bf16.msra.mxu0 %v764
        %774 = vmatprep.subr.bf16.mxu0 0
        %775 = vmatpush1.bf16.msra.mxu0 0
        %776 = vmatprep.subr.bf16.mxu0 0
        %777 = vmatpush1.bf16.msra.mxu0 0
        %778 = vmatprep.subr.bf16.mxu0 0
        %779 = vmatpush1.bf16.msra.mxu0 0
        %780 = vmatprep.subr.bf16.mxu0 0
        %781 = vmatpush1.bf16.msra.mxu0 0
        %782 = vmatprep.subr.bf16.mxu0 0
        %783 = vmatpush1.bf16.msra.mxu0 0
        %784 = vmatprep.subr.bf16.mxu0 0
        %785 = vmatpush1.bf16.msra.mxu0 0
        %786 = vmatprep.subr.bf16.mxu0 0
        %787 = vmatpush1.bf16.msra.mxu0 0
        %788 = vmatprep.subr.bf16.mxu0 0
        %789 = vmatpush1.bf16.msra.mxu0 0
        %790 = vmatprep.subr.bf16.mxu0 0
        %791 = vmatpush1.bf16.msra.mxu0 0
        %792 = vmatprep.subr.bf16.mxu0 0
        %793 = vmatpush1.bf16.msra.mxu0 0
        %794 = vmatprep.subr.bf16.mxu0 0
        %795 = vmatpush1.bf16.msra.mxu0 0
        %796 = vmatprep.subr.bf16.mxu0 0
        %797 = vmatpush1.bf16.msra.mxu0 0
        %798 = vmatprep.subr.bf16.mxu0 0
        %799 = vmatpush1.bf16.msra.mxu0 0
        %800 = vmatprep.subr.bf16.mxu0 0
        %801 = vmatpush1.bf16.msra.mxu0 0
        %802 = vmatprep.mubr.bf16.mxu0 0
        %803 = vmatmul.mubr.bf16.gmra.mrb[0].mxu0 %v768
        %v804 = vpop.f32.mrb[0].mxu0
        %v805 = vadd.f32 %v745, %v804
        %v806 = vpop.f32.mrb[0].mxu0
        %v807 = vpop.f32.mrb[0].mxu0
        %v808 = vpop.f32.mrb[0].mxu0
        %809 = vdwg.mxu0
        %v810 = vmax.f32 %v805, 0.0
        %v812 = vrot.slane %v810, 4
        %v813 = vrot.slane %v810, 5
        %v816 = vadd.f32 %v733, %v812
        %v817 = vadd.f32 %v734, %v813
        %v818 = vpack.c.bf16 %v816, %v816
        %v819 = vpack.c.bf16 %v817, %v817
        %s820 = scalar_lea.vmem %s2, 32
        %v821 = vld [vmem:[%s820] sm:$0xf]
        %v822 = vld [vmem:[%s820 + $0x4] sm:$0xf]
        %v823 = vld [vmem:[%s820 + $0x8] sm:$0xf]
        %v824 = vld [vmem:[%s820 + $0xc] sm:$0xf]
        %v825 = vlaneseq
        %v826 = vshrl.u32 %v825, 7
        %v827 = vsub.s32 3, %v826
        %v828 = vrot.slane %v279, %v827
        %v831 = vunpack.c.l.b16 %v818
        %v832 = vunpack.c.l.b16 %v819
        %v833 = vrot.slane %v831, 4
        %v834 = vrot.slane %v832, 3
        %v835 = vsel %vm752, %v834, %v833
        %v836 = vpack.c.b16 %v835, %v835
        %v841 = vunpack.c.l.b16 %v821
        %v842 = vunpack.c.l.b16 %v822
        %v843 = vunpack.c.l.b16 %v823
        %v844 = vunpack.c.l.b16 %v824
        %v845 = vpack.c.b16 %v842, %v841
        %v846 = vpack.c.b16 %v844, %v843
        %v850 = vsel %vm386, %v836, 0
        %852 = vmatprep.subr.bf16.mxu0 0
        %853 = vmatpush1.bf16.msra.mxu0 %v845
        %854 = vmatprep.subr.bf16.mxu0 0
        %855 = vmatpush1.bf16.msra.mxu0 %v846
        %856 = vmatprep.subr.bf16.mxu0 0
        %857 = vmatpush1.bf16.msra.mxu0 0
        %858 = vmatprep.subr.bf16.mxu0 0
        %859 = vmatpush1.bf16.msra.mxu0 0
        %860 = vmatprep.subr.bf16.mxu0 0
        %861 = vmatpush1.bf16.msra.mxu0 0
        %862 = vmatprep.subr.bf16.mxu0 0
        %863 = vmatpush1.bf16.msra.mxu0 0
        %864 = vmatprep.subr.bf16.mxu0 0
        %865 = vmatpush1.bf16.msra.mxu0 0
        %866 = vmatprep.subr.bf16.mxu0 0
        %867 = vmatpush1.bf16.msra.mxu0 0
        %868 = vmatprep.subr.bf16.mxu0 0
        %869 = vmatpush1.bf16.msra.mxu0 0
        %870 = vmatprep.subr.bf16.mxu0 0
        %871 = vmatpush1.bf16.msra.mxu0 0
        %872 = vmatprep.subr.bf16.mxu0 0
        %873 = vmatpush1.bf16.msra.mxu0 0
        %874 = vmatprep.subr.bf16.mxu0 0
        %875 = vmatpush1.bf16.msra.mxu0 0
        %876 = vmatprep.subr.bf16.mxu0 0
        %877 = vmatpush1.bf16.msra.mxu0 0
        %878 = vmatprep.subr.bf16.mxu0 0
        %879 = vmatpush1.bf16.msra.mxu0 0
        %880 = vmatprep.subr.bf16.mxu0 0
        %881 = vmatpush1.bf16.msra.mxu0 0
        %882 = vmatprep.subr.bf16.mxu0 0
        %883 = vmatpush1.bf16.msra.mxu0 0
        %884 = vmatprep.mubr.bf16.mxu0 0
        %885 = vmatmul.mubr.bf16.gmra.mrb[0].mxu0 %v850
        %v886 = vpop.f32.mrb[0].mxu0
        %v887 = vadd.f32 %v828, %v886
        %v888 = vpop.f32.mrb[0].mxu0
        %v889 = vpop.f32.mrb[0].mxu0
        %v890 = vpop.f32.mrb[0].mxu0
        %891 = vdwg.mxu0
        %v894 = vunpack.c.l.s4 1966171168
        %v895 = vunpack.c.0.s8 %v894
        %v896 = vlaneseq
        %v897 = vshrl.u32 %v896, 7
        %v898 = vsub.s32 %v895, %v897
        %v899 = vrot.slane %v887, %v898
        %v900 = vcombine.high %v899, %v899
        %v902 = vunpack.c.l.s4 1966171168
        %v903 = vunpack.c.0.s8 %v902
        %v904 = vlaneseq
        %v905 = vshrl.u32 %v904, 7
        %v906 = vsub.s32 %v903, %v905
        %v907 = vrot.slane %v899, %v906
        %v909 = vunpack.c.l.s4 1966171168
        %v910 = vunpack.c.0.s8 %v909
        %v911 = vlaneseq
        %v912 = vshrl.u32 %v911, 7
        %v913 = vsub.s32 %v910, %v912
        %v914 = vrot.slane %v900, %v913
        %vm917 = vcmask 253952
        %v918 = vsel %vm917, %v907, 0.0
        %v919 = vsel %vm917, %v914, 0.0
        %v920 = vadd.f32 %v918, %v919
        %921 = vst.msk [vmem:[%s271] sm:$0x1] %vm917, %v920
        %s922 = sand.u32 %s181, 1
        %s923 = scalar_lea.sflag [#allocation3], %s922
        %s924 = sand.u32 %s181, 1
        %s925 = scalar_lea.vmem [#allocation2], %s924
        // Predicated region
        $region49: #{tpu_custom_call.1} parent=47 // pred_check
          %p926 = pneg %p191
        $region50: #{tpu_custom_call.1} parent=47 // pred_check_branch
          %928 = sbr.rel (%p926) target = $region52
        $region51: #{tpu_custom_call.1} parent=47 // pred_region
          %s930 = ssub.s32 16, 16
          %931 = vsyncadd %s923, %s930
          %s932 = smul.addr %s21, 16
          %s933 = scalar_lea.hbm %s7, %s932
          %s935 = sshll.u32 %s925, 4
          %s936 = int_to_ptr.vmem [resolvable:$true] %s935
          %938 = dma.vmem_to_hbm [thread:$0]  %s936, 16, %s933, %s923
        $region52: #{tpu_custom_call.1} parent=47 // pred_fallthru
          _
      $region48: #{tpu_custom_call.1} parent=5 // pred_fallthru
        _
      %p939 = scmp.le.s32.totalorder 2, %s16
      // Predicated region
      $region53: #{tpu_custom_call.1} parent=5 // pred_check
        %p940 = pneg %p939
      $region54: #{tpu_custom_call.1} parent=5 // pred_check_branch
        %942 = sbr.rel (%p940) target = $region56
      $region55: #{tpu_custom_call.1} parent=5 // pred_region
        %s943 = ssub.s32 %s16, 2
        // Predicated region
        $region57: #{tpu_custom_call.1} parent=55 // pred_check
          %p944 = pneg %p197
        $region58: #{tpu_custom_call.1} parent=55 // pred_check_branch
          %946 = sbr.rel (%p944) target = $region60
        $region59: #{tpu_custom_call.1} parent=55 // pred_region
          %s947 = sand.u32 %s182, 1
          %s948 = scalar_lea.sflag [#allocation3], %s947
          %s949 = sand.u32 %s182, 1
          %s950 = scalar_lea.vmem [#allocation2], %s949
          %951 = dma.done %s948, 16
        $region60: #{tpu_custom_call.1} parent=55 // pred_fallthru
          _
      $region56: #{tpu_custom_call.1} parent=5 // pred_fallthru
        _
    $region6: #{tpu_custom_call.1} parent=1 // loop_footer
      %s20 = sadd.s32 1, %s16
    $region7: #{tpu_custom_call.1} parent=1 // loop_footer_branch
      %15 = sbr.rel target = $region3
    $region8: #{tpu_custom_call.1} parent=1 // loop_exit
      _
    %952 = vsyncpa [#allocation3], 1
    %s953 = scalar_lea.sflag [#allocation3], 1
    %954 = vsyncpa %s953, 1

</llo_original>
